<compile_context>
chip_gen: v7x
topology: tpu7x:2x2x1
jax: 0.10.0
libtpu: 0.0.40
codegen_flags: <defaults>
</compile_context>

<pallas_src>
import functools

import jax
import jax.numpy as jnp
from jax.experimental import pallas as pl
from jax.experimental.pallas import tpu as pltpu


# --------------------------------------------------------------------------
# Parameter slab layout (shared by the packer and the kernel).
# --------------------------------------------------------------------------
_ROW_ALIGN = 16          # bf16 sublane packing: 16 rows per (16,128) tile


def _round_up(n, m):
    return ((n + m - 1) // m) * m


def _layout(input_dim, n_models, hidden_dim):
    D, H, M = input_dim, hidden_dim, n_models
    h2, h4 = H // 2, H // 4
    hpad = _round_up(h4, 128)        # lane-aligned half width of the fused matmul
    blocks = [
        ("ce_w1", D, H),             # context_encoder Linear 1 weight
        ("ce_b1", 1, H),
        ("ce_w2", H, h2),            # context_encoder Linear 2 weight
        ("ce_b2", 1, h2),
        ("feat_w", h2, 2 * hpad),    # [wg_w1 | pp_w1(feat part)], each half 128-aligned
        ("wg_b1", 1, hpad),          # zero-padded beyond h4
        ("wg_w2", hpad, M + 1),      # zero pad rows beyond h4, zero pad column M
        ("wg_b2", 1, M + 1),         # pad column bias = -1e30 (softmax pad lane -> 0)
        ("pp_w1w", M + 1, hpad),     # pp_w1 (weights part) + zero pad row, cols padded
        ("pp_b1", 1, hpad),          # zero-padded beyond h4
        ("pp_w2r", 1, hpad),         # pp_w2 transposed to a row (VPU head), zero-padded
        ("pp_b2", 1, 1),
    ]
    offs = {}
    row = 0
    for name, r, c in blocks:
        offs[name] = (row, r, c)     # (row offset, rows, cols); 16-aligned start
        row += _round_up(r, _ROW_ALIGN)
    total_rows = _round_up(row, _ROW_ALIGN)
    width = _round_up(max(H, h2, 2 * hpad, M + 1), 128)
    return offs, total_rows, width, hpad


def pack_params(params, dtype=jnp.bfloat16):
    """Pack the PyTorch-equivalent parameter dict into one 2-D bf16 slab."""
    f32 = jnp.float32
    ce_w1 = params["ce_w1"]
    D, H = ce_w1.shape
    h2, h4 = H // 2, H // 4
    M = params["wg_w2"].shape[1]

    offs, total_rows, width, hpad = _layout(D, M, H)

    def pad_to(a, rows, cols):
        a = a.astype(f32)
        return jnp.pad(a, ((0, rows - a.shape[0]), (0, cols - a.shape[1])))

    feat_w = jnp.concatenate(
        [pad_to(params["wg_w1"], h2, hpad),
         pad_to(params["pp_w1"][:h2, :], h2, hpad)], axis=1)
    wg_b1 = pad_to(params["wg_b1"], 1, hpad)
    wg_w2 = jnp.concatenate(
        [pad_to(params["wg_w2"], hpad, M), jnp.zeros((hpad, 1), f32)], axis=1)
    wg_b2 = jnp.concatenate(
        [params["wg_b2"].astype(f32), jnp.full((1, 1), -1e30, f32)], axis=1)
    pp_w1w = pad_to(
        jnp.concatenate([params["pp_w1"][h2:, :].astype(f32),
                         jnp.zeros((1, h4), f32)], axis=0), M + 1, hpad)
    pp_b1 = pad_to(params["pp_b1"], 1, hpad)
    pp_w2r = pad_to(params["pp_w2"].T, 1, hpad)

    entries = {
        "ce_w1": params["ce_w1"].astype(f32),
        "ce_b1": params["ce_b1"].astype(f32),
        "ce_w2": params["ce_w2"].astype(f32),
        "ce_b2": params["ce_b2"].astype(f32),
        "feat_w": feat_w,
        "wg_b1": wg_b1,
        "wg_w2": wg_w2,
        "wg_b2": wg_b2,
        "pp_w1w": pp_w1w,
        "pp_b1": pp_b1,
        "pp_w2r": pp_w2r,
        "pp_b2": params["pp_b2"].astype(f32),
    }
    slab = jnp.zeros((total_rows, width), f32)
    for name, arr in entries.items():
        r0, r, c = offs[name]
        assert arr.shape == (r, c), (name, arr.shape, (r, c))
        slab = slab.at[r0:r0 + r, 0:c].set(arr)
    return slab.astype(dtype)


# --------------------------------------------------------------------------
# Kernel
# --------------------------------------------------------------------------
def _meta_kernel(x_ref, p_ref, out_ref, *, offs, hpad):
    f32 = jnp.float32
    bf16 = jnp.bfloat16

    def blk(name, dtype=None):
        r0, r, c = offs[name]
        v = p_ref[r0:r0 + r, 0:c]
        return v if dtype is None else v.astype(dtype)

    x = x_ref[...].astype(bf16)

    # ---- context_encoder: Linear -> ReLU -> (Dropout = eval identity) -> Linear -> ReLU
    h1 = jnp.maximum(
        jnp.dot(x, blk("ce_w1"), preferred_element_type=f32) + blk("ce_b1", f32), 0.0)
    # TODO(synk): training-mode Dropout(0.2) not implemented (eval-mode identity).
    feat = jnp.maximum(
        jnp.dot(h1.astype(bf16), blk("ce_w2"), preferred_element_type=f32)
        + blk("ce_b2", f32), 0.0)

    # ---- fused matmul feeding weight_generator L1 and perf-predictor L1 (feat half).
    #      Each half is padded to `hpad` (multiple of 128) lanes so the split is a view.
    fused = jnp.dot(feat.astype(bf16), blk("feat_w"), preferred_element_type=f32)
    g1 = jnp.maximum(fused[:, 0:hpad] + blk("wg_b1", f32), 0.0)
    p1_feat = fused[:, hpad:2 * hpad]

    # ---- weight_generator: Linear -> Softmax over an (M+1)-wide frame.
    # Pad column has zero weights and a -1e30 bias -> contributes exp(-1e30)=0,
    # so lanes [0, M) are the exact softmax over M models.
    logits = (jnp.dot(g1.astype(bf16), blk("wg_w2"), preferred_element_type=f32)
              + blk("wg_b2", f32))
    m = jnp.max(logits, axis=1, keepdims=True)
    e = jnp.exp(logits - m)
    # Exact division (not approx reciprocal) so sum(weights) == 1 to f32 rounding.
    weights = e / jnp.sum(e, axis=1, keepdims=True)

    # ---- performance_predictor on cat([feat, weights]):
    #      feat half came from the fused matmul; weights half is its own tiny matmul
    #      (pp_w1w has a zero row matching the padded softmax lane).
    p1 = jnp.maximum(
        p1_feat
        + jnp.dot(weights.astype(bf16), blk("pp_w1w"), preferred_element_type=f32)
        + blk("pp_b1", f32),
        0.0)
    # N=1 head as VPU multiply + lane reduce (no full-width MXU pass).
    perf_logit = jnp.sum(p1 * blk("pp_w2r", f32), axis=1, keepdims=True) + blk("pp_b2", f32)
    perf = 1.0 / (1.0 + jnp.exp(-perf_logit))

    # ---- single lane-packed output: lanes [0, M) = weights, lane M = perf.
    n_out = out_ref.shape[1]                                   # = n_models + 1
    col = jax.lax.broadcasted_iota(jnp.int32, weights.shape, 1)
    out_ref[...] = jnp.where(col < n_out - 1, weights, perf).astype(out_ref.dtype)


# --------------------------------------------------------------------------
# Wrapper
# --------------------------------------------------------------------------
@functools.partial(jax.jit, static_argnames=("n_models", "hidden_dim", "tile_b"))
def meta_learning_forward(context, packed_params, *, n_models, hidden_dim,
                          tile_b=2048):
    B, D = context.shape
    M = n_models
    offs, total_rows, width, hpad = _layout(D, M, hidden_dim)

    # Batch tile: big enough to amortize per-step overhead, but force >= 2 grid
    # steps when B allows it so the "parallel" batch axis engages both v7x TCs.
    # Context/output are f32 -> sublane multiple of 8 is sufficient.
    n_steps = max(2, pl.cdiv(B, tile_b))
    tb = max(8, _round_up(pl.cdiv(B, n_steps), 8))
    tb = min(tb, _round_up(B, 8))
    grid = (pl.cdiv(B, tb),)

    kernel = functools.partial(_meta_kernel, offs=offs, hpad=hpad)

    packed_out = pl.pallas_call(
        kernel,
        out_shape=jax.ShapeDtypeStruct((B, M + 1), context.dtype),
        grid_spec=pltpu.PrefetchScalarGridSpec(
            num_scalar_prefetch=0,
            grid=grid,
            in_specs=[
                pl.BlockSpec((tb, D), lambda i: (i, 0)),              # batch tile
                pl.BlockSpec((total_rows, width), lambda i: (0, 0)),  # resident weights
            ],
            out_specs=pl.BlockSpec((tb, M + 1), lambda i: (i, 0)),
        ),
        compiler_params=pltpu.CompilerParams(
            dimension_semantics=("parallel",),   # v7x: split batch across 2 TCs
        ),
    )(context, packed_params)

    return packed_out[:, :M], packed_out[:, M:]


# --------------------------------------------------------------------------
# Init + pure-JAX reference
# --------------------------------------------------------------------------
def init_params(key, input_dim, n_models, hidden_dim=128, dtype=jnp.float32):
    """PyTorch-Linear-style init (uniform +-1/sqrt(fan_in)); weights are [in, out]."""
    h2, h4 = hidden_dim // 2, hidden_dim // 4

    def linear(k, fan_in, fan_out):
        kw, kb = jax.random.split(k)
        bound = 1.0 / (fan_in ** 0.5)
        w = jax.random.uniform(kw, (fan_in, fan_out), dtype, -bound, bound)
        b = jax.random.uniform(kb, (1, fan_out), dtype, -bound, bound)
        return w, b

    keys = jax.random.split(key, 6)
    ce_w1, ce_b1 = linear(keys[0], input_dim, hidden_dim)
    ce_w2, ce_b2 = linear(keys[1], hidden_dim, h2)
    wg_w1, wg_b1 = linear(keys[2], h2, h4)
    wg_w2, wg_b2 = linear(keys[3], h4, n_models)
    pp_w1, pp_b1 = linear(keys[4], h2 + n_models, h4)
    pp_w2, pp_b2 = linear(keys[5], h4, 1)

    return dict(
        ce_w1=ce_w1, ce_b1=ce_b1, ce_w2=ce_w2, ce_b2=ce_b2,
        wg_w1=wg_w1, wg_b1=wg_b1, wg_w2=wg_w2, wg_b2=wg_b2,
        pp_w1=pp_w1, pp_b1=pp_b1, pp_w2=pp_w2, pp_b2=pp_b2,
    )


def reference_forward(context, params):
    relu = lambda v: jnp.maximum(v, 0.0)
    h1 = relu(context @ params["ce_w1"] + params["ce_b1"])
    feat = relu(h1 @ params["ce_w2"] + params["ce_b2"])
    g1 = relu(feat @ params["wg_w1"] + params["wg_b1"])
    logits = g1 @ params["wg_w2"] + params["wg_b2"]
    weights = jax.nn.softmax(logits, axis=1)
    comb = jnp.concatenate([feat, weights], axis=1)
    p1 = relu(comb @ params["pp_w1"] + params["pp_b1"])
    perf = jax.nn.sigmoid(p1 @ params["pp_w2"] + params["pp_b2"])
    return weights, perf


if __name__ == "__main__":
    input_dim = 16
    n_models = 4
    hidden_dim = 32
    batch = 8

    key = jax.random.PRNGKey(0)
    k_ctx, k_par = jax.random.split(key)

    context = jax.random.normal(k_ctx, (batch, input_dim), jnp.float32)
    params = init_params(k_par, input_dim, n_models, hidden_dim)
    packed = pack_params(params)          # bf16 slab (MXU native operand dtype)

    weights, perf = meta_learning_forward(
        context, packed, n_models=n_models, hidden_dim=hidden_dim)
    jax.block_until_ready((weights, perf))

    ref_w, ref_p = reference_forward(context, params)
    assert weights.shape == (batch, n_models)
    assert perf.shape == (batch, 1)
    # Element-wise tolerance accounts for bf16 MXU operands (f32 accumulation).
    assert jnp.allclose(weights, ref_w, atol=2e-2, rtol=2e-2)
    assert jnp.allclose(perf, ref_p, atol=2e-2, rtol=2e-2)
    # Softmax normalization uses exact division, so the sum is tight.
    assert jnp.allclose(jnp.sum(weights, axis=1), 1.0, atol=1e-3)

    print("KERNEL_OK")
</pallas_src>

<mosaic_0001>
module attributes {stable_mosaic.version = 11 : i64} {
  func.func @_meta_kernel(%arg0: i32, %arg1: memref<8x16xf32, #tpu.memory_space<vmem>>, %arg2: memref<320x256xbf16, #tpu.memory_space<vmem>>, %arg3: memref<8x5xf32, #tpu.memory_space<vmem>>) attributes {dimension_semantics = [#tpu.dimension_semantics<parallel>], iteration_bounds = array<i64: 1>, scalar_prefetch = 0 : i64, scratch_operands = 0 : i64, tpu.core_type = #tpu.core_type<tc>, window_params = [{transform_indices = @transform_0, window_bounds = array<i64: 8, 16>}, {pipeline_mode = #tpu.pipeline_mode<synchronous>, transform_indices = @transform_1, window_bounds = array<i64: 320, 256>}, {transform_indices = @transform_2, window_bounds = array<i64: 8, 5>}]} {
    %c0 = arith.constant 0 : index
    %c0_0 = arith.constant 0 : index
    %0 = vector.load %arg1[%c0, %c0_0] : memref<8x16xf32, #tpu.memory_space<vmem>>, vector<8x16xf32>
    %1 = arith.truncf %0 : vector<8x16xf32> to vector<8x16xbf16>
    %c0_1 = arith.constant 0 : index
    %c0_2 = arith.constant 0 : index
    %2 = vector.load %arg2[%c0_1, %c0_2] : memref<320x256xbf16, #tpu.memory_space<vmem>>, vector<16x32xbf16>
    %cst = arith.constant dense<0.000000e+00> : vector<8x32xf32>
    %3 = tpu.matmul %1, %2, %cst {dimension_numbers = #tpu.dot_dimension_numbers<[1], [0], [0], [1], [0, 0, 1, 1], [], []>} : vector<8x16xbf16>, vector<16x32xbf16>, vector<8x32xf32> -> vector<8x32xf32>
    %c16 = arith.constant 16 : index
    %c0_3 = arith.constant 0 : index
    %4 = vector.load %arg2[%c16, %c0_3] : memref<320x256xbf16, #tpu.memory_space<vmem>>, vector<1x32xbf16>
    %5 = arith.extf %4 : vector<1x32xbf16> to vector<1x32xf32>
    %6 = vector.broadcast %5 : vector<1x32xf32> to vector<8x32xf32>
    %7 = arith.addf %3, %6 : vector<8x32xf32>
    %cst_4 = arith.constant 0.000000e+00 : f32
    %8 = vector.broadcast %cst_4 : f32 to vector<8x32xf32>
    %9 = arith.maximumf %7, %8 : vector<8x32xf32>
    %10 = arith.truncf %9 : vector<8x32xf32> to vector<8x32xbf16>
    %c32 = arith.constant 32 : index
    %c0_5 = arith.constant 0 : index
    %11 = vector.load %arg2[%c32, %c0_5] : memref<320x256xbf16, #tpu.memory_space<vmem>>, vector<32x16xbf16>
    %cst_6 = arith.constant dense<0.000000e+00> : vector<8x16xf32>
    %12 = tpu.matmul %10, %11, %cst_6 {dimension_numbers = #tpu.dot_dimension_numbers<[1], [0], [0], [1], [0, 0, 1, 1], [], []>} : vector<8x32xbf16>, vector<32x16xbf16>, vector<8x16xf32> -> vector<8x16xf32>
    %c64 = arith.constant 64 : index
    %c0_7 = arith.constant 0 : index
    %13 = vector.load %arg2[%c64, %c0_7] : memref<320x256xbf16, #tpu.memory_space<vmem>>, vector<1x16xbf16>
    %14 = arith.extf %13 : vector<1x16xbf16> to vector<1x16xf32>
    %15 = vector.broadcast %14 : vector<1x16xf32> to vector<8x16xf32>
    %16 = arith.addf %12, %15 : vector<8x16xf32>
    %cst_8 = arith.constant 0.000000e+00 : f32
    %17 = vector.broadcast %cst_8 : f32 to vector<8x16xf32>
    %18 = arith.maximumf %16, %17 : vector<8x16xf32>
    %19 = arith.truncf %18 : vector<8x16xf32> to vector<8x16xbf16>
    %c80 = arith.constant 80 : index
    %c0_9 = arith.constant 0 : index
    %20 = vector.load %arg2[%c80, %c0_9] : memref<320x256xbf16, #tpu.memory_space<vmem>>, vector<16x256xbf16>
    %cst_10 = arith.constant dense<0.000000e+00> : vector<8x256xf32>
    %21 = tpu.matmul %19, %20, %cst_10 {dimension_numbers = #tpu.dot_dimension_numbers<[1], [0], [0], [1], [0, 0, 1, 1], [], []>} : vector<8x16xbf16>, vector<16x256xbf16>, vector<8x256xf32> -> vector<8x256xf32>
    %22 = vector.extract_strided_slice %21 {offsets = [0, 0], sizes = [8, 128], strides = [1, 1]} : vector<8x256xf32> to vector<8x128xf32>
    %c96 = arith.constant 96 : index
    %c0_11 = arith.constant 0 : index
    %23 = vector.load %arg2[%c96, %c0_11] : memref<320x256xbf16, #tpu.memory_space<vmem>>, vector<1x128xbf16>
    %24 = arith.extf %23 : vector<1x128xbf16> to vector<1x128xf32>
    %25 = vector.broadcast %24 : vector<1x128xf32> to vector<8x128xf32>
    %26 = arith.addf %22, %25 : vector<8x128xf32>
    %cst_12 = arith.constant 0.000000e+00 : f32
    %27 = vector.broadcast %cst_12 : f32 to vector<8x128xf32>
    %28 = arith.maximumf %26, %27 : vector<8x128xf32>
    %29 = vector.extract_strided_slice %21 {offsets = [0, 128], sizes = [8, 128], strides = [1, 1]} : vector<8x256xf32> to vector<8x128xf32>
    %30 = arith.truncf %28 : vector<8x128xf32> to vector<8x128xbf16>
    %c112 = arith.constant 112 : index
    %c0_13 = arith.constant 0 : index
    %31 = vector.load %arg2[%c112, %c0_13] : memref<320x256xbf16, #tpu.memory_space<vmem>>, vector<128x5xbf16>
    %cst_14 = arith.constant dense<0.000000e+00> : vector<8x5xf32>
    %32 = tpu.matmul %30, %31, %cst_14 {dimension_numbers = #tpu.dot_dimension_numbers<[1], [0], [0], [1], [0, 0, 1, 1], [], []>} : vector<8x128xbf16>, vector<128x5xbf16>, vector<8x5xf32> -> vector<8x5xf32>
    %c240 = arith.constant 240 : index
    %c0_15 = arith.constant 0 : index
    %33 = vector.load %arg2[%c240, %c0_15] : memref<320x256xbf16, #tpu.memory_space<vmem>>, vector<1x5xbf16>
    %34 = arith.extf %33 : vector<1x5xbf16> to vector<1x5xf32>
    %35 = vector.broadcast %34 : vector<1x5xf32> to vector<8x5xf32>
    %36 = arith.addf %32, %35 : vector<8x5xf32>
    %cst_16 = arith.constant dense<0xFF800000> : vector<8xf32>
    %37 = vector.multi_reduction <maximumf>, %36, %cst_16 [1] : vector<8x5xf32> to vector<8xf32>
    %38 = vector.shape_cast %37 : vector<8xf32> to vector<8x1xf32>
    %39 = vector.broadcast %38 : vector<8x1xf32> to vector<8x5xf32>
    %40 = arith.subf %36, %39 : vector<8x5xf32>
    %41 = math.exp %40 : vector<8x5xf32>
    %cst_17 = arith.constant dense<0.000000e+00> : vector<8xf32>
    %42 = vector.multi_reduction <add>, %41, %cst_17 [1] : vector<8x5xf32> to vector<8xf32>
    %43 = vector.shape_cast %42 : vector<8xf32> to vector<8x1xf32>
    %44 = vector.broadcast %43 : vector<8x1xf32> to vector<8x5xf32>
    %45 = arith.divf %41, %44 : vector<8x5xf32>
    %46 = arith.truncf %45 : vector<8x5xf32> to vector<8x5xbf16>
    %c256 = arith.constant 256 : index
    %c0_18 = arith.constant 0 : index
    %47 = vector.load %arg2[%c256, %c0_18] : memref<320x256xbf16, #tpu.memory_space<vmem>>, vector<5x128xbf16>
    %cst_19 = arith.constant dense<0.000000e+00> : vector<8x128xf32>
    %48 = tpu.matmul %46, %47, %cst_19 {dimension_numbers = #tpu.dot_dimension_numbers<[1], [0], [0], [1], [0, 0, 1, 1], [], []>} : vector<8x5xbf16>, vector<5x128xbf16>, vector<8x128xf32> -> vector<8x128xf32>
    %49 = arith.addf %29, %48 : vector<8x128xf32>
    %c272 = arith.constant 272 : index
    %c0_20 = arith.constant 0 : index
    %50 = vector.load %arg2[%c272, %c0_20] : memref<320x256xbf16, #tpu.memory_space<vmem>>, vector<1x128xbf16>
    %51 = arith.extf %50 : vector<1x128xbf16> to vector<1x128xf32>
    %52 = vector.broadcast %51 : vector<1x128xf32> to vector<8x128xf32>
    %53 = arith.addf %49, %52 : vector<8x128xf32>
    %cst_21 = arith.constant 0.000000e+00 : f32
    %54 = vector.broadcast %cst_21 : f32 to vector<8x128xf32>
    %55 = arith.maximumf %53, %54 : vector<8x128xf32>
    %c288 = arith.constant 288 : index
    %c0_22 = arith.constant 0 : index
    %56 = vector.load %arg2[%c288, %c0_22] : memref<320x256xbf16, #tpu.memory_space<vmem>>, vector<1x128xbf16>
    %57 = arith.extf %56 : vector<1x128xbf16> to vector<1x128xf32>
    %58 = vector.broadcast %57 : vector<1x128xf32> to vector<8x128xf32>
    %59 = arith.mulf %55, %58 : vector<8x128xf32>
    %cst_23 = arith.constant dense<0.000000e+00> : vector<8xf32>
    %60 = vector.multi_reduction <add>, %59, %cst_23 [1] : vector<8x128xf32> to vector<8xf32>
    %61 = vector.shape_cast %60 : vector<8xf32> to vector<8x1xf32>
    %c304 = arith.constant 304 : index
    %c0_24 = arith.constant 0 : index
    %62 = vector.load %arg2[%c304, %c0_24] : memref<320x256xbf16, #tpu.memory_space<vmem>>, vector<1x1xbf16>
    %63 = arith.extf %62 : vector<1x1xbf16> to vector<1x1xf32>
    %64 = vector.broadcast %63 : vector<1x1xf32> to vector<8x1xf32>
    %65 = arith.addf %61, %64 : vector<8x1xf32>
    %cst_25 = arith.constant 0.000000e+00 : f32
    %66 = vector.broadcast %cst_25 : f32 to vector<8x1xf32>
    %67 = arith.subf %66, %65 : vector<8x1xf32>
    %68 = math.exp %67 : vector<8x1xf32>
    %cst_26 = arith.constant 1.000000e+00 : f32
    %69 = vector.broadcast %cst_26 : f32 to vector<8x1xf32>
    %70 = arith.addf %69, %68 : vector<8x1xf32>
    %cst_27 = arith.constant 1.000000e+00 : f32
    %71 = vector.broadcast %cst_27 : f32 to vector<8x1xf32>
    %72 = arith.divf %71, %70 : vector<8x1xf32>
    %73 = tpu.iota {dimensions = array<i32: 1>} : vector<8x5xi32>
    %c4_i32 = arith.constant 4 : i32
    %74 = vector.broadcast %c4_i32 : i32 to vector<8x5xi32>
    %75 = arith.cmpi slt, %73, %74 : vector<8x5xi32>
    %76 = vector.shape_cast %72 : vector<8x1xf32> to vector<8x1xf32>
    %77 = vector.broadcast %76 : vector<8x1xf32> to vector<8x5xf32>
    %78 = arith.select %75, %45, %77 : vector<8x5xi1>, vector<8x5xf32>
    %c0_28 = arith.constant 0 : index
    %c0_29 = arith.constant 0 : index
    %79 = vector.load %arg3[%c0_28, %c0_29] : memref<8x5xf32, #tpu.memory_space<vmem>>, vector<8x5xf32>
    tpu.vector_store %arg3[%c0_28, %c0_29], %78 {strides = array<i32>} : memref<8x5xf32, #tpu.memory_space<vmem>>, vector<8x5xf32>,
    return
  }
  func.func @transform_0(%arg0: i32) -> (i32, i32) {
    %c0_i32 = arith.constant 0 : i32
    %c0_i32_0 = arith.constant 0 : i32
    return %arg0, %c0_i32 : i32, i32
  }
  func.func @transform_1(%arg0: i32) -> (i32, i32) {
    %c0_i32 = arith.constant 0 : i32
    %c0_i32_0 = arith.constant 0 : i32
    %c0_i32_1 = arith.constant 0 : i32
    return %c0_i32, %c0_i32_0 : i32, i32
  }
  func.func @transform_2(%arg0: i32) -> (i32, i32) {
    %c0_i32 = arith.constant 0 : i32
    %c0_i32_0 = arith.constant 0 : i32
    return %arg0, %c0_i32 : i32, i32
  }
}

</mosaic_0001>

<llo_original>
// kernel: meta_learning_forward.1
$region0: #{meta_learning_forward.1}
  #allocation0 [shape = 'u32[]', space=smem, size = 0x4, offset = 0x4, fixed_abs, tag = 'smem constant byte address 0x4 - core index']
  #allocation1 [shape = 'u32[144,128]{1,0:T(1,128)}', space=vmem, size = 0x12000, scoped, tag = 'internal scratch']
  %s0 = inlined_call_operand.hbm [shape: f32[8,16], index: 0, kind: input, shape index: {}]
  %s1 = inlined_call_operand.hbm [shape: bf16[320,256], index: 1, kind: input, shape index: {}]
  %s2 = inlined_call_operand.vmem [shape: f32[8,5], index: 2, kind: output, shape index: {}]
  %s3 = sld [smem:[#allocation0]]
  $region26: #{meta_learning_forward.1} parent=0
    _
  %s5 = ssub.s32 1, %s3
  %s6 = scalar_select 0, %s5, %s3
  $region1: #{meta_learning_forward.1} parent=0
    #allocation2 [shape = 'u8[4096]{0}', space=vmem, size = 0x1000, scoped, tag = 'input window, operand 0, single buffered']
    #allocation3 [shape = 's32[1]{0}', space=sflag, size = 0x4, scoped, tag = 'scoped memory for meta_learning_forward.1']
    #allocation4 [shape = 'u8[163840]{0}', space=vmem, size = 0x28000, scoped, tag = 'input window, operand 1, single buffered']
    #allocation5 [shape = 's32[1]{0}', space=sflag, size = 0x4, scoped, tag = 'scoped memory for meta_learning_forward.1']
    %7 = vsyncpa [#allocation3], 0
    %8 = vsyncpa [#allocation5], 0
    // Predicated region
    $region2: #{meta_learning_forward.1} parent=1 // pred_check
      _
    $region3: #{meta_learning_forward.1} parent=1 // pred_check_branch
      %10 = sbr.rel (0) target = $region5
    $region4: #{meta_learning_forward.1} parent=1 // pred_region
      %s12 = ssub.s32 128, 128
      %13 = vsyncadd [#allocation3], %s12
      %s15 = sshll.u32 [#allocation2], 4
      %s16 = int_to_ptr.vmem [resolvable:$true] %s15
      %18 = dma.hbm_to_vmem [thread:$0]  %s0, 128, %s16, [#allocation3]
    $region5: #{meta_learning_forward.1} parent=1 // pred_fallthru
      _
    // Predicated region
    $region6: #{meta_learning_forward.1} parent=1 // pred_check
      _
    $region7: #{meta_learning_forward.1} parent=1 // pred_check_branch
      %20 = sbr.rel (0) target = $region9
    $region8: #{meta_learning_forward.1} parent=1 // pred_region
      %s22 = ssub.s32 5120, 5120
      %23 = vsyncadd [#allocation5], %s22
      %s24 = sshll.u32 [#allocation4], 4
      %s25 = int_to_ptr.vmem [resolvable:$true] %s24
      %30 = dma.hbm_to_vmem [thread:$0]  %s1, 5120, %s25, [#allocation5], 128, 128, 8
    $region9: #{meta_learning_forward.1} parent=1 // pred_fallthru
      _
    // Predicated region
    $region10: #{meta_learning_forward.1} parent=1 // pred_check
      _
    $region11: #{meta_learning_forward.1} parent=1 // pred_check_branch
      %32 = sbr.rel (0) target = $region13
    $region12: #{meta_learning_forward.1} parent=1 // pred_region
      %33 = dma.done [#allocation3], 128
    $region13: #{meta_learning_forward.1} parent=1 // pred_fallthru
      _
    // Predicated region
    $region14: #{meta_learning_forward.1} parent=1 // pred_check
      _
    $region15: #{meta_learning_forward.1} parent=1 // pred_check_branch
      %35 = sbr.rel (0) target = $region17
    $region16: #{meta_learning_forward.1} parent=1 // pred_region
      %36 = dma.done [#allocation5], 5120
    $region17: #{meta_learning_forward.1} parent=1 // pred_fallthru
      _
    %v38 = vld [vmem:[#allocation2] sm:$0xff]
    %v39 = vpack.c.bf16 %v38, %v38
    %v40 = vld [vmem:[#allocation4] sm:$0xf]
    %v41 = vld [vmem:[#allocation4 + $0x8] sm:$0xf]
    %v42 = vld [vmem:[#allocation4 + $0x10] sm:$0x1]
    %v43 = vunpack.c.l.bf16 %v42
    %v44 = vlaneseq
    %v45 = vshrl.u32 %v44, 7
    %v46 = vsub.s32 0, %v45
    %v47 = vrot.slane %v43, %v46
    %v50 = vunpack.c.l.b16 %v40
    %v51 = vunpack.c.l.b16 %v41
    %v52 = vpack.c.b16 %v51, %v50
    %vm54 = vcmask 130048
    %v56 = vsel %vm54, %v39, 0
    %58 = vmatprep.subr.bf16.mxu0 0
    %59 = vmatpush1.bf16.msra.mxu0 %v52
    %60 = vmatprep.subr.bf16.mxu0 0
    %61 = vmatpush1.bf16.msra.mxu0 0
    %62 = vmatprep.subr.bf16.mxu0 0
    %63 = vmatpush1.bf16.msra.mxu0 0
    %64 = vmatprep.subr.bf16.mxu0 0
    %65 = vmatpush1.bf16.msra.mxu0 0
    %66 = vmatprep.subr.bf16.mxu0 0
    %67 = vmatpush1.bf16.msra.mxu0 0
    %68 = vmatprep.subr.bf16.mxu0 0
    %69 = vmatpush1.bf16.msra.mxu0 0
    %70 = vmatprep.subr.bf16.mxu0 0
    %71 = vmatpush1.bf16.msra.mxu0 0
    %72 = vmatprep.subr.bf16.mxu0 0
    %73 = vmatpush1.bf16.msra.mxu0 0
    %74 = vmatprep.subr.bf16.mxu0 0
    %75 = vmatpush1.bf16.msra.mxu0 0
    %76 = vmatprep.subr.bf16.mxu0 0
    %77 = vmatpush1.bf16.msra.mxu0 0
    %78 = vmatprep.subr.bf16.mxu0 0
    %79 = vmatpush1.bf16.msra.mxu0 0
    %80 = vmatprep.subr.bf16.mxu0 0
    %81 = vmatpush1.bf16.msra.mxu0 0
    %82 = vmatprep.subr.bf16.mxu0 0
    %83 = vmatpush1.bf16.msra.mxu0 0
    %84 = vmatprep.subr.bf16.mxu0 0
    %85 = vmatpush1.bf16.msra.mxu0 0
    %86 = vmatprep.subr.bf16.mxu0 0
    %87 = vmatpush1.bf16.msra.mxu0 0
    %88 = vmatprep.subr.bf16.mxu0 0
    %89 = vmatpush1.bf16.msra.mxu0 0
    %90 = vmatprep.mubr.bf16.mxu0 0
    %91 = vmatmul.mubr.bf16.gmra.mrb[0].mxu0 %v56
    %v92 = vpop.f32.mrb[0].mxu0
    %v93 = vadd.f32 %v47, %v92
    %v94 = vpop.f32.mrb[0].mxu0
    %v95 = vpop.f32.mrb[0].mxu0
    %v96 = vpop.f32.mrb[0].mxu0
    %97 = vdwg.mxu0
    %v98 = vmax.f32 %v93, 0.0
    %v99 = vpack.c.bf16 %v98, %v98
    %v100 = vld [vmem:[#allocation4 + $0x20] sm:$0xf]
    %v101 = vld [vmem:[#allocation4 + $0x28] sm:$0xf]
    %v102 = vld [vmem:[#allocation4 + $0x30] sm:$0xf]
    %v103 = vld [vmem:[#allocation4 + $0x38] sm:$0xf]
    %v104 = vld [vmem:[#allocation4 + $0x40] sm:$0x1]
    %v105 = vunpack.c.l.bf16 %v104
    %v106 = vlaneseq
    %v107 = vshrl.u32 %v106, 7
    %v108 = vsub.s32 0, %v107
    %v109 = vrot.slane %v105, %v108
    %v114 = vunpack.c.l.b16 %v100
    %v115 = vunpack.c.l.b16 %v101
    %v116 = vunpack.c.l.b16 %v102
    %v117 = vunpack.c.l.b16 %v103
    %v118 = vpack.c.b16 %v115, %v114
    %v119 = vpack.c.b16 %v117, %v116
    %vm122 = vcmask 261120
    %v124 = vsel %vm122, %v99, 0
    %126 = vmatprep.subr.bf16.mxu0 0
    %127 = vmatpush1.bf16.msra.mxu0 %v118
    %128 = vmatprep.subr.bf16.mxu0 0
    %129 = vmatpush1.bf16.msra.mxu0 %v119
    %130 = vmatprep.subr.bf16.mxu0 0
    %131 = vmatpush1.bf16.msra.mxu0 0
    %132 = vmatprep.subr.bf16.mxu0 0
    %133 = vmatpush1.bf16.msra.mxu0 0
    %134 = vmatprep.subr.bf16.mxu0 0
    %135 = vmatpush1.bf16.msra.mxu0 0
    %136 = vmatprep.subr.bf16.mxu0 0
    %137 = vmatpush1.bf16.msra.mxu0 0
    %138 = vmatprep.subr.bf16.mxu0 0
    %139 = vmatpush1.bf16.msra.mxu0 0
    %140 = vmatprep.subr.bf16.mxu0 0
    %141 = vmatpush1.bf16.msra.mxu0 0
    %142 = vmatprep.subr.bf16.mxu0 0
    %143 = vmatpush1.bf16.msra.mxu0 0
    %144 = vmatprep.subr.bf16.mxu0 0
    %145 = vmatpush1.bf16.msra.mxu0 0
    %146 = vmatprep.subr.bf16.mxu0 0
    %147 = vmatpush1.bf16.msra.mxu0 0
    %148 = vmatprep.subr.bf16.mxu0 0
    %149 = vmatpush1.bf16.msra.mxu0 0
    %150 = vmatprep.subr.bf16.mxu0 0
    %151 = vmatpush1.bf16.msra.mxu0 0
    %152 = vmatprep.subr.bf16.mxu0 0
    %153 = vmatpush1.bf16.msra.mxu0 0
    %154 = vmatprep.subr.bf16.mxu0 0
    %155 = vmatpush1.bf16.msra.mxu0 0
    %156 = vmatprep.subr.bf16.mxu0 0
    %157 = vmatpush1.bf16.msra.mxu0 0
    %158 = vmatprep.mubr.bf16.mxu0 0
    %159 = vmatmul.mubr.bf16.gmra.mrb[0].mxu0 %v124
    %v160 = vpop.f32.mrb[0].mxu0
    %v161 = vadd.f32 %v109, %v160
    %v162 = vpop.f32.mrb[0].mxu0
    %v163 = vpop.f32.mrb[0].mxu0
    %v164 = vpop.f32.mrb[0].mxu0
    %165 = vdwg.mxu0
    %v166 = vmax.f32 %v161, 0.0
    %v167 = vpack.c.bf16 %v166, %v166
    %v168 = vld [vmem:[#allocation4 + $0x50] sm:$0xff]
    %v169 = vld [vmem:[#allocation4 + $0x58] sm:$0xff]
    %v172 = vunpack.c.l.b16 %v168
    %v173 = vunpack.c.h.b16 %v168
    %v174 = vunpack.c.l.b16 %v169
    %v175 = vunpack.c.h.b16 %v169
    %v176 = vpack.c.b16 %v174, %v172
    %v177 = vpack.c.b16 %v175, %v173
    %v181 = vsel %vm54, %v167, 0
    %183 = vmatprep.subr.bf16.mxu0 %v177
    %184 = vmatpush1.bf16.msra.mxu0 %v176
    %185 = vmatprep.subr.bf16.mxu0 0
    %186 = vmatpush1.bf16.msra.mxu0 0
    %187 = vmatprep.subr.bf16.mxu0 0
    %188 = vmatpush1.bf16.msra.mxu0 0
    %189 = vmatprep.subr.bf16.mxu0 0
    %190 = vmatpush1.bf16.msra.mxu0 0
    %191 = vmatprep.subr.bf16.mxu0 0
    %192 = vmatpush1.bf16.msra.mxu0 0
    %193 = vmatprep.subr.bf16.mxu0 0
    %194 = vmatpush1.bf16.msra.mxu0 0
    %195 = vmatprep.subr.bf16.mxu0 0
    %196 = vmatpush1.bf16.msra.mxu0 0
    %197 = vmatprep.subr.bf16.mxu0 0
    %198 = vmatpush1.bf16.msra.mxu0 0
    %199 = vmatprep.subr.bf16.mxu0 0
    %200 = vmatpush1.bf16.msra.mxu0 0
    %201 = vmatprep.subr.bf16.mxu0 0
    %202 = vmatpush1.bf16.msra.mxu0 0
    %203 = vmatprep.subr.bf16.mxu0 0
    %204 = vmatpush1.bf16.msra.mxu0 0
    %205 = vmatprep.subr.bf16.mxu0 0
    %206 = vmatpush1.bf16.msra.mxu0 0
    %207 = vmatprep.subr.bf16.mxu0 0
    %208 = vmatpush1.bf16.msra.mxu0 0
    %209 = vmatprep.subr.bf16.mxu0 0
    %210 = vmatpush1.bf16.msra.mxu0 0
    %211 = vmatprep.subr.bf16.mxu0 0
    %212 = vmatpush1.bf16.msra.mxu0 0
    %213 = vmatprep.subr.bf16.mxu0 0
    %214 = vmatpush1.bf16.msra.mxu0 0
    %215 = vmatprep.mubr.bf16.mxu0 0
    %216 = vmatmul.mubr.bf16.gmra.mrb[0].mxu0 %v181
    %v217 = vpop.f32.mrb[0].mxu0
    %v218 = vadd.f32 0.0, %v217
    %v219 = vpop.f32.mrb[0].mxu0
    %v220 = vadd.f32 0.0, %v219
    %v221 = vpop.f32.mrb[0].mxu0
    %v222 = vpop.f32.mrb[0].mxu0
    %223 = vdwg.mxu0
    %v224 = vld [vmem:[#allocation4 + $0x60] sm:$0x1]
    %v225 = vunpack.c.l.bf16 %v224
    %v226 = vlaneseq
    %v227 = vshrl.u32 %v226, 7
    %v228 = vsub.s32 0, %v227
    %v229 = vrot.slane %v225, %v228
    %v230 = vadd.f32 %v218, %v229
    %v231 = vmax.f32 %v230, 0.0
    %v232 = vpack.c.bf16 %v231, %v231
    %v233 = vld [vmem:[#allocation4 + $0x70] sm:$0xf]
    %v234 = vld [vmem:[#allocation4 + $0x78] sm:$0xf]
    %v235 = vld [vmem:[#allocation4 + $0x80] sm:$0xf]
    %v236 = vld [vmem:[#allocation4 + $0x88] sm:$0xf]
    %v237 = vld [vmem:[#allocation4 + $0x90] sm:$0xf]
    %v238 = vld [vmem:[#allocation4 + $0x98] sm:$0xf]
    %v239 = vld [vmem:[#allocation4 + $0xa0] sm:$0xf]
    %v240 = vld [vmem:[#allocation4 + $0xa8] sm:$0xf]
    %v241 = vld [vmem:[#allocation4 + $0xb0] sm:$0xf]
    %v242 = vld [vmem:[#allocation4 + $0xb8] sm:$0xf]
    %v243 = vld [vmem:[#allocation4 + $0xc0] sm:$0xf]
    %v244 = vld [vmem:[#allocation4 + $0xc8] sm:$0xf]
    %v245 = vld [vmem:[#allocation4 + $0xd0] sm:$0xf]
    %v246 = vld [vmem:[#allocation4 + $0xd8] sm:$0xf]
    %v247 = vld [vmem:[#allocation4 + $0xe0] sm:$0xf]
    %v248 = vld [vmem:[#allocation4 + $0xe8] sm:$0xf]
    %v249 = vld [vmem:[#allocation4 + $0xf0] sm:$0x1]
    %v250 = vunpack.c.l.bf16 %v249
    %v251 = vlaneseq
    %v252 = vshrl.u32 %v251, 7
    %v253 = vsub.s32 0, %v252
    %v254 = vrot.slane %v250, %v253
    %v271 = vunpack.c.l.b16 %v233
    %v272 = vunpack.c.l.b16 %v234
    %v273 = vunpack.c.l.b16 %v235
    %v274 = vunpack.c.l.b16 %v236
    %v275 = vunpack.c.l.b16 %v237
    %v276 = vunpack.c.l.b16 %v238
    %v277 = vunpack.c.l.b16 %v239
    %v278 = vunpack.c.l.b16 %v240
    %v279 = vunpack.c.l.b16 %v241
    %v280 = vunpack.c.l.b16 %v242
    %v281 = vunpack.c.l.b16 %v243
    %v282 = vunpack.c.l.b16 %v244
    %v283 = vunpack.c.l.b16 %v245
    %v284 = vunpack.c.l.b16 %v246
    %v285 = vunpack.c.l.b16 %v247
    %v286 = vunpack.c.l.b16 %v248
    %v287 = vpack.c.b16 %v272, %v271
    %v288 = vpack.c.b16 %v274, %v273
    %v289 = vpack.c.b16 %v276, %v275
    %v290 = vpack.c.b16 %v278, %v277
    %v291 = vpack.c.b16 %v280, %v279
    %v292 = vpack.c.b16 %v282, %v281
    %v293 = vpack.c.b16 %v284, %v283
    %v294 = vpack.c.b16 %v286, %v285
    %303 = vmatprep.subr.bf16.mxu0 0
    %304 = vmatpush1.bf16.msra.mxu0 %v287
    %305 = vmatprep.subr.bf16.mxu0 0
    %306 = vmatpush1.bf16.msra.mxu0 %v288
    %307 = vmatprep.subr.bf16.mxu0 0
    %308 = vmatpush1.bf16.msra.mxu0 %v289
    %309 = vmatprep.subr.bf16.mxu0 0
    %310 = vmatpush1.bf16.msra.mxu0 %v290
    %311 = vmatprep.subr.bf16.mxu0 0
    %312 = vmatpush1.bf16.msra.mxu0 %v291
    %313 = vmatprep.subr.bf16.mxu0 0
    %314 = vmatpush1.bf16.msra.mxu0 %v292
    %315 = vmatprep.subr.bf16.mxu0 0
    %316 = vmatpush1.bf16.msra.mxu0 %v293
    %317 = vmatprep.subr.bf16.mxu0 0
    %318 = vmatpush1.bf16.msra.mxu0 %v294
    %319 = vmatprep.subr.bf16.mxu0 0
    %320 = vmatpush1.bf16.msra.mxu0 0
    %321 = vmatprep.subr.bf16.mxu0 0
    %322 = vmatpush1.bf16.msra.mxu0 0
    %323 = vmatprep.subr.bf16.mxu0 0
    %324 = vmatpush1.bf16.msra.mxu0 0
    %325 = vmatprep.subr.bf16.mxu0 0
    %326 = vmatpush1.bf16.msra.mxu0 0
    %327 = vmatprep.subr.bf16.mxu0 0
    %328 = vmatpush1.bf16.msra.mxu0 0
    %329 = vmatprep.subr.bf16.mxu0 0
    %330 = vmatpush1.bf16.msra.mxu0 0
    %331 = vmatprep.subr.bf16.mxu0 0
    %332 = vmatpush1.bf16.msra.mxu0 0
    %333 = vmatprep.subr.bf16.mxu0 0
    %334 = vmatpush1.bf16.msra.mxu0 0
    %335 = vmatprep.mubr.bf16.mxu0 0
    %336 = vmatmul.mubr.bf16.gmra.mrb[0].mxu0 %v232
    %v337 = vpop.f32.mrb[0].mxu0
    %v338 = vadd.f32 %v254, %v337
    %v339 = vpop.f32.mrb[0].mxu0
    %v340 = vpop.f32.mrb[0].mxu0
    %v341 = vpop.f32.mrb[0].mxu0
    %342 = vdwg.mxu0
    %vm343 = vcmask 39936
    %v344 = vsel %vm343, %v338, -inf
    %345 = vmax.xlane.f32.xlu0 %v344
    %v346 = vpop.xlane.xlu0 %345
    %v347 = vsub.f32 %v338, %v346
    %v348 = vmul.f32 %v347, 1.442695
    %v349 = vpow.pop %v348
    %v350 = vsel %vm343, %v349, 0.0
    %351 = vadd.xlane.f32.xlu0 %v350
    %v352 = vpop.xlane.xlu0 %351
    %v353 = vrcp.pop %v352
    %v354 = vmul.f32 %v349, %v353
    %v355 = vpack.c.bf16 %v354, %v354
    %v356 = vld [vmem:[#allocation4 + $0x100] sm:$0x7]
    %v358 = vsel %vm343, %v355, 0
    %vm360 = vcmask 1041408
    %vm361 = vcmask 1042432
    %v362 = vsel %vm360, 4294967295, 65535
    %v363 = vsel %vm361, %v362, 0
    %v365 = vand.u32 %v356, %v363
    %367 = vmatprep.subr.bf16.mxu0 0
    %368 = vmatpush1.bf16.msra.mxu0 %v365
    %369 = vmatprep.subr.bf16.mxu0 0
    %370 = vmatpush1.bf16.msra.mxu0 0
    %371 = vmatprep.subr.bf16.mxu0 0
    %372 = vmatpush1.bf16.msra.mxu0 0
    %373 = vmatprep.subr.bf16.mxu0 0
    %374 = vmatpush1.bf16.msra.mxu0 0
    %375 = vmatprep.subr.bf16.mxu0 0
    %376 = vmatpush1.bf16.msra.mxu0 0
    %377 = vmatprep.subr.bf16.mxu0 0
    %378 = vmatpush1.bf16.msra.mxu0 0
    %379 = vmatprep.subr.bf16.mxu0 0
    %380 = vmatpush1.bf16.msra.mxu0 0
    %381 = vmatprep.subr.bf16.mxu0 0
    %382 = vmatpush1.bf16.msra.mxu0 0
    %383 = vmatprep.subr.bf16.mxu0 0
    %384 = vmatpush1.bf16.msra.mxu0 0
    %385 = vmatprep.subr.bf16.mxu0 0
    %386 = vmatpush1.bf16.msra.mxu0 0
    %387 = vmatprep.subr.bf16.mxu0 0
    %388 = vmatpush1.bf16.msra.mxu0 0
    %389 = vmatprep.subr.bf16.mxu0 0
    %390 = vmatpush1.bf16.msra.mxu0 0
    %391 = vmatprep.subr.bf16.mxu0 0
    %392 = vmatpush1.bf16.msra.mxu0 0
    %393 = vmatprep.subr.bf16.mxu0 0
    %394 = vmatpush1.bf16.msra.mxu0 0
    %395 = vmatprep.subr.bf16.mxu0 0
    %396 = vmatpush1.bf16.msra.mxu0 0
    %397 = vmatprep.subr.bf16.mxu0 0
    %398 = vmatpush1.bf16.msra.mxu0 0
    %399 = vmatprep.mubr.bf16.mxu0 0
    %400 = vmatmul.mubr.bf16.gmra.mrb[0].mxu0 %v358
    %v401 = vpop.f32.mrb[0].mxu0
    %v402 = vadd.f32 0.0, %v401
    %v403 = vpop.f32.mrb[0].mxu0
    %v404 = vpop.f32.mrb[0].mxu0
    %v405 = vpop.f32.mrb[0].mxu0
    %406 = vdwg.mxu0
    %v407 = vadd.f32 %v220, %v402
    %v408 = vld [vmem:[#allocation4 + $0x110] sm:$0x1]
    %v409 = vunpack.c.l.bf16 %v408
    %v410 = vlaneseq
    %v411 = vshrl.u32 %v410, 7
    %v412 = vsub.s32 0, %v411
    %v413 = vrot.slane %v409, %v412
    %v414 = vadd.f32 %v407, %v413
    %v415 = vmax.f32 %v414, 0.0
    %v416 = vld [vmem:[#allocation4 + $0x120] sm:$0x1]
    %v417 = vunpack.c.l.bf16 %v416
    %v418 = vlaneseq
    %v419 = vshrl.u32 %v418, 7
    %v420 = vsub.s32 0, %v419
    %v421 = vrot.slane %v417, %v420
    %v422 = vmul.f32 %v415, %v421
    %423 = vadd.xlane.f32.xlu0 %v422
    %v424 = vpop.xlane.xlu0 %423
    %v425 = vld [vmem:[#allocation4 + $0x130] sm:$0x1]
    %v426 = vunpack.c.l.bf16 %v425
    %v427 = vlaneseq
    %v428 = vshrl.u32 %v427, 7
    %v429 = vsub.s32 0, %v428
    %v430 = vrot.slane %v426, %v429
    %v431 = vadd.f32 %v424, %v430
    %v432 = vsub.f32 0.0, %v431
    %v433 = vmul.f32 %v432, 1.442695
    %v434 = vpow.pop %v433
    %v435 = vadd.f32 %v434, 1.0
    %v436 = vrcp.pop %v435
    %v437 = vmul.f32 1.0, %v436
    %v438 = vlaneseq
    %v439 = vand.u32 %v438, 127
    %vm440 = vcmp.lt.s32.totalorder %v439, 4
    %442 = vset.pattern.permute.xlu0 0
    %443 = vperm.xlu0 %442, %v437
    %v444 = vpop.permute.xlu0 %443
    %v446 = vsel %vm440, %v354, %v444
    %447 = vst.msk [vmem:[%s2] sm:$0xff] %vm343, %v446
    // Predicated region
    $region18: #{meta_learning_forward.1} parent=1 // pred_check
      _
    $region19: #{meta_learning_forward.1} parent=1 // pred_check_branch
      %449 = sbr.rel (0) target = $region21
    $region20: #{meta_learning_forward.1} parent=1 // pred_region
      _
    $region21: #{meta_learning_forward.1} parent=1 // pred_fallthru
      _
    // Predicated region
    $region22: #{meta_learning_forward.1} parent=1 // pred_check
      _
    $region23: #{meta_learning_forward.1} parent=1 // pred_check_branch
      %451 = sbr.rel (0) target = $region25
    $region24: #{meta_learning_forward.1} parent=1 // pred_region
      _
    $region25: #{meta_learning_forward.1} parent=1 // pred_fallthru
      _
    %452 = vsyncpa [#allocation3], 1
    %453 = vsyncpa [#allocation5], 1

</llo_original>
